<compile_context>
chip_gen: v6e
topology: v6e:2x2x1
jax: 0.10.0
libtpu: 0.0.40
codegen_flags: <defaults>
</compile_context>

<pallas_src>
import functools

import jax
import jax.numpy as jnp
from jax import lax
from jax.experimental import pallas as pl
from jax.experimental.pallas import tpu as pltpu


def _head_kernel(x_ref, w_ref, o_ref, *, scale, h, use_bf16):
    """One grid step: a (Bt, T, C) slab of the batch.

    x_ref: (Bt, T, C)     activations
    w_ref: (C, 3*H)       fused [Wk | Wq | Wv]
    o_ref: (Bt, T, H)     output
    """
    x = x_ref[...]                      # (Bt, T, C)
    w = w_ref[...]                      # (C, 3*H)

    # Fused QKV projection: one MXU pass with N = 3*H instead of three skinny ones.
    kqv = lax.dot_general(
        x, w,
        dimension_numbers=(((2,), (0,)), ((), ())),
        preferred_element_type=jnp.float32,
    )                                   # (Bt, T, 3*H), f32

    k = kqv[..., 0 * h:1 * h]                       # (Bt, T, H)
    q = kqv[..., 1 * h:2 * h] * scale               # scale folded into q (T*H VALU work)
    v = kqv[..., 2 * h:3 * h]                       # (Bt, T, H)

    if use_bf16:
        # Native bf16 MXU operands; accumulation stays f32 via preferred_element_type.
        q = q.astype(jnp.bfloat16)
        k = k.astype(jnp.bfloat16)

    # scores = q @ k^T without materializing a transpose (batched dot_general).
    scores = lax.dot_general(
        q, k,
        dimension_numbers=(((2,), (2,)), ((0,), (0,))),
        preferred_element_type=jnp.float32,
    )                                   # (Bt, T, T), f32

    # Causal (tril) mask. NOTE: scores are f32 (preferred_element_type), so the
    # large finite -1e30 is representable; it would overflow to -inf in bf16.
    T = scores.shape[-1]
    row = lax.broadcasted_iota(jnp.int32, (T, T), 0)
    col = lax.broadcasted_iota(jnp.int32, (T, T), 1)
    causal = (col <= row)[None, :, :]
    scores = jnp.where(causal, scores, -1e30)

    # Numerically stable softmax; normalization deferred until after the PV
    # matmul (T*H multiplies instead of T*T, one less (Bt,T,T) intermediate).
    m = jnp.max(scores, axis=-1, keepdims=True)
    p = jnp.exp(scores - m)                          # (Bt, T, T)
    l = jnp.sum(p, axis=-1, keepdims=True)           # (Bt, T, 1)

    if use_bf16:
        p = p.astype(jnp.bfloat16)
        v = v.astype(jnp.bfloat16)

    pv = lax.dot_general(
        p, v,
        dimension_numbers=(((2,), (1,)), ((0,), (0,))),
        preferred_element_type=jnp.float32,
    )                                   # (Bt, T, H), f32

    # EUP reciprocal + one Newton-Raphson refinement (~full f32 accuracy).
    inv_l = pl.reciprocal(l, approx=True)
    inv_l = inv_l * (2.0 - l * inv_l)

    o_ref[...] = (pv * inv_l).astype(o_ref.dtype)


def _pick_batch_tile(B, T, C, H, x_itemsize, w_itemsize, o_itemsize,
                     vmem_capacity_bytes):
    """Largest divisor of B whose per-step working set fits ~70% of physical VMEM,
    capped so the grid keeps >=2 (ideally 4) steps for pipelining / megacore."""
    budget = int(vmem_capacity_bytes * 0.70)

    # Resident fused weight (constant index_map), still double-buffered by the pipeline.
    fixed = 2 * C * (3 * H) * w_itemsize

    per_b = (
        2 * T * C * x_itemsize        # x tile (double-buffered)
        + 2 * T * H * o_itemsize      # output tile (double-buffered)
        + T * 3 * H * 4               # fused kqv (f32)
        + 3 * T * H * 4               # k/q/v slice copies (not views)
        + 3 * T * T * 4               # scores + p + mask/exp intermediates (f32)
        + T * H * 4                   # PV accumulator before cast
    )

    if fixed + per_b > vmem_capacity_bytes:
        # TODO(synk): fall back to a flash-attention tiling (grid over
        # (batch, q_tile, kv_tile)) instead of failing — the dense (T,T) slab
        # is the hard wall here, hit at roughly half the T on v7x (64 MiB/TC).
        raise ValueError(
            f"Dense attention working set ({(fixed + per_b) / 2**20:.1f} MiB for a "
            f"single batch element) exceeds VMEM capacity "
            f"({vmem_capacity_bytes / 2**20:.1f} MiB); needs flash-attention tiling."
        )

    avail = max(budget - fixed, per_b)
    bt = max(1, min(B, avail // per_b))

    # Keep >=2 (ideally 4) grid steps so x/out DMA pipelines behind compute and
    # v7x's two TensorCores both get slices of the "parallel" batch axis.
    if B >= 4:
        min_steps = 4
    elif B >= 2:
        min_steps = 2
    else:
        min_steps = 1
    bt = min(bt, max(1, B // min_steps))

    while B % bt:
        bt -= 1
    return bt


def head_forward(x, wk, wq, wv, *, use_bf16_matmul=None):
    """Single-head causal self-attention.

    x:  (B, T, C)
    wk, wq, wv: (C, H)   (i.e. nn.Linear(n_embd, head_size).weight.T)
    returns: (B, T, H)
    """
    B, T, C = x.shape
    Cw, H = wk.shape
    assert Cw == C and wq.shape == (C, H) and wv.shape == (C, H)

    if use_bf16_matmul is None:
        use_bf16_matmul = (x.dtype == jnp.bfloat16)

    # Fused, UNPADDED QKV weight: contracted/output dims don't need 128-lane
    # padding at toy H; this keeps MXU work, kqv VMEM and output HBM traffic at
    # the true H width (no wrapper-side slice copy either).
    wkqv = jnp.concatenate([wk, wq, wv], axis=-1)        # (C, 3*H)

    scale = float(H) ** -0.5

    # Generation-aware VMEM budget (128 MiB v5e/v6e, 64 MiB per TC on v7x).
    try:
        vmem_capacity = int(pltpu.get_tpu_info().vmem_capacity_bytes)
    except Exception:
        vmem_capacity = 64 * 1024 * 1024   # conservative v7x per-TC fallback

    Bt = _pick_batch_tile(B, T, C, H,
                          x.dtype.itemsize, wkqv.dtype.itemsize, x.dtype.itemsize,
                          vmem_capacity)
    grid = (B // Bt,)

    flops = 2 * B * T * (3 * C * H + 2 * T * H)
    bytes_accessed = (B * T * C * x.dtype.itemsize
                      + C * 3 * H * wkqv.dtype.itemsize
                      + B * T * H * x.dtype.itemsize)
    cost = pl.CostEstimate(flops=flops,
                           transcendentals=B * T * T,
                           bytes_accessed=bytes_accessed)

    kernel = functools.partial(_head_kernel, scale=scale, h=H,
                               use_bf16=use_bf16_matmul)

    out = pl.pallas_call(
        kernel,
        out_shape=jax.ShapeDtypeStruct((B, T, H), x.dtype),
        grid_spec=pltpu.PrefetchScalarGridSpec(
            num_scalar_prefetch=0,
            grid=grid,
            in_specs=[
                pl.BlockSpec((Bt, T, C), lambda b: (b, 0, 0)),
                # Constant index_map over the batch axis -> weights stay resident
                # in VMEM across grid steps (no per-step re-DMA).
                pl.BlockSpec((C, 3 * H), lambda b: (0, 0)),
            ],
            out_specs=pl.BlockSpec((Bt, T, H), lambda b: (b, 0, 0)),
        ),
        compiler_params=pltpu.CompilerParams(
            dimension_semantics=("parallel",),
            vmem_limit_bytes=int(vmem_capacity * 0.85),
        ),
        cost_estimate=cost,
    )(x, wkqv)

    return out


def reference_head(x, wk, wq, wv):
    """Pure-JAX reference matching the PyTorch forward semantics."""
    k = x @ wk
    q = x @ wq
    v = x @ wv
    scale = wk.shape[-1] ** -0.5
    wei = jnp.einsum("btd,bsd->bts", q, k) * scale
    T = x.shape[1]
    tril = jnp.tril(jnp.ones((T, T), dtype=bool))
    wei = jnp.where(tril, wei, -jnp.inf)
    wei = jax.nn.softmax(wei, axis=-1)
    return wei @ v


if __name__ == "__main__":
    # Small shapes consistent with the module: B=2, T=8 (<= max_len), C=n_embd=32, H=head_size=16.
    B, T, C, H = 2, 8, 32, 16

    key = jax.random.PRNGKey(0)
    kx, kk, kq, kv = jax.random.split(key, 4)

    x = jax.random.normal(kx, (B, T, C), dtype=jnp.float32)
    # Deterministic parameter init (like nn.Linear weights, stored transposed as (C, H)).
    wk = jax.random.normal(kk, (C, H), dtype=jnp.float32) * (C ** -0.5)
    wq = jax.random.normal(kq, (C, H), dtype=jnp.float32) * (C ** -0.5)
    wv = jax.random.normal(kv, (C, H), dtype=jnp.float32) * (C ** -0.5)

    out = head_forward(x, wk, wq, wv)
    out = jax.block_until_ready(out)

    ref = reference_head(x, wk, wq, wv)
    assert out.shape == (B, T, H)
    assert jnp.allclose(out, ref, atol=1e-4, rtol=1e-4), "mismatch vs reference"

    print("KERNEL_OK")
</pallas_src>

<mosaic_0001>
module attributes {stable_mosaic.version = 11 : i64} {
  func.func @_head_kernel(%arg0: i32, %arg1: memref<1x8x32xf32, #tpu.memory_space<vmem>>, %arg2: memref<32x48xf32, #tpu.memory_space<vmem>>, %arg3: memref<1x8x16xf32, #tpu.memory_space<vmem>>) attributes {dimension_semantics = [#tpu.dimension_semantics<parallel>], iteration_bounds = array<i64: 2>, scalar_prefetch = 0 : i64, scratch_operands = 0 : i64, tpu.core_type = #tpu.core_type<tc>, window_params = [{transform_indices = @transform_0, window_bounds = array<i64: 1, 8, 32>}, {pipeline_mode = #tpu.pipeline_mode<synchronous>, transform_indices = @transform_1, window_bounds = array<i64: 32, 48>}, {transform_indices = @transform_2, window_bounds = array<i64: 1, 8, 16>}]} {
    %c0 = arith.constant 0 : index
    %c0_0 = arith.constant 0 : index
    %c0_1 = arith.constant 0 : index
    %0 = vector.load %arg1[%c0, %c0_0, %c0_1] : memref<1x8x32xf32, #tpu.memory_space<vmem>>, vector<1x8x32xf32>
    %c0_2 = arith.constant 0 : index
    %c0_3 = arith.constant 0 : index
    %1 = vector.load %arg2[%c0_2, %c0_3] : memref<32x48xf32, #tpu.memory_space<vmem>>, vector<32x48xf32>
    %cst = arith.constant dense<0.000000e+00> : vector<1x8x48xf32>
    %2 = tpu.matmul %0, %1, %cst {dimension_numbers = #tpu.dot_dimension_numbers<[2], [0], [0, 1], [1], [0, 0, 0, 1, 1, 1], [], []>} : vector<1x8x32xf32>, vector<32x48xf32>, vector<1x8x48xf32> -> vector<1x8x48xf32>
    %3 = vector.extract_strided_slice %2 {offsets = [0, 0, 0], sizes = [1, 8, 16], strides = [1, 1, 1]} : vector<1x8x48xf32> to vector<1x8x16xf32>
    %4 = vector.extract_strided_slice %2 {offsets = [0, 0, 16], sizes = [1, 8, 16], strides = [1, 1, 1]} : vector<1x8x48xf32> to vector<1x8x16xf32>
    %cst_4 = arith.constant 2.500000e-01 : f32
    %5 = vector.broadcast %cst_4 : f32 to vector<1x8x16xf32>
    %6 = arith.mulf %4, %5 : vector<1x8x16xf32>
    %7 = vector.extract_strided_slice %2 {offsets = [0, 0, 32], sizes = [1, 8, 16], strides = [1, 1, 1]} : vector<1x8x48xf32> to vector<1x8x16xf32>
    %cst_5 = arith.constant dense<0.000000e+00> : vector<1x8x8xf32>
    %8 = tpu.matmul %6, %3, %cst_5 {dimension_numbers = #tpu.dot_dimension_numbers<[2], [2], [1], [1], [0, 0, 0, 1, 1, 1], [0], [0]>} : vector<1x8x16xf32>, vector<1x8x16xf32>, vector<1x8x8xf32> -> vector<1x8x8xf32>
    %9 = tpu.iota {dimensions = array<i32: 0>} : vector<8x8xi32>
    %10 = tpu.iota {dimensions = array<i32: 1>} : vector<8x8xi32>
    %11 = arith.cmpi sle, %10, %9 : vector<8x8xi32>
    %12 = vector.shape_cast %11 : vector<8x8xi1> to vector<1x8x8xi1>
    %cst_6 = arith.constant -1.000000e+30 : f32
    %13 = vector.broadcast %cst_6 : f32 to vector<1x8x8xf32>
    %14 = arith.select %12, %8, %13 : vector<1x8x8xi1>, vector<1x8x8xf32>
    %cst_7 = arith.constant dense<0xFF800000> : vector<1x8xf32>
    %15 = vector.multi_reduction <maximumf>, %14, %cst_7 [2] : vector<1x8x8xf32> to vector<1x8xf32>
    %16 = vector.shape_cast %15 : vector<1x8xf32> to vector<1x8x1xf32>
    %17 = vector.broadcast %16 : vector<1x8x1xf32> to vector<1x8x8xf32>
    %18 = arith.subf %14, %17 : vector<1x8x8xf32>
    %19 = math.exp %18 : vector<1x8x8xf32>
    %cst_8 = arith.constant dense<0.000000e+00> : vector<1x8xf32>
    %20 = vector.multi_reduction <add>, %19, %cst_8 [2] : vector<1x8x8xf32> to vector<1x8xf32>
    %21 = vector.shape_cast %20 : vector<1x8xf32> to vector<1x8x1xf32>
    %cst_9 = arith.constant dense<0.000000e+00> : vector<1x8x16xf32>
    %22 = tpu.matmul %19, %7, %cst_9 {dimension_numbers = #tpu.dot_dimension_numbers<[2], [1], [1], [2], [0, 0, 0, 1, 1, 2], [0], [0]>} : vector<1x8x8xf32>, vector<1x8x16xf32>, vector<1x8x16xf32> -> vector<1x8x16xf32>
    %23 = tpu.reciprocal %21 {approx = true} : vector<1x8x1xf32> -> vector<1x8x1xf32>
    %24 = arith.mulf %21, %23 : vector<1x8x1xf32>
    %cst_10 = arith.constant 2.000000e+00 : f32
    %25 = vector.broadcast %cst_10 : f32 to vector<1x8x1xf32>
    %26 = arith.subf %25, %24 : vector<1x8x1xf32>
    %27 = arith.mulf %23, %26 : vector<1x8x1xf32>
    %28 = vector.broadcast %27 : vector<1x8x1xf32> to vector<1x8x16xf32>
    %29 = arith.mulf %22, %28 : vector<1x8x16xf32>
    %c0_11 = arith.constant 0 : index
    %c0_12 = arith.constant 0 : index
    %c0_13 = arith.constant 0 : index
    %30 = vector.load %arg3[%c0_11, %c0_12, %c0_13] : memref<1x8x16xf32, #tpu.memory_space<vmem>>, vector<1x8x16xf32>
    tpu.vector_store %arg3[%c0_11, %c0_12, %c0_13], %29 {strides = array<i32>} : memref<1x8x16xf32, #tpu.memory_space<vmem>>, vector<1x8x16xf32>,
    return
  }
  func.func @transform_0(%arg0: i32) -> (i32, i32, i32) {
    %c0_i32 = arith.constant 0 : i32
    %c0_i32_0 = arith.constant 0 : i32
    %c0_i32_1 = arith.constant 0 : i32
    return %arg0, %c0_i32, %c0_i32_0 : i32, i32, i32
  }
  func.func @transform_1(%arg0: i32) -> (i32, i32) {
    %c0_i32 = arith.constant 0 : i32
    %c0_i32_0 = arith.constant 0 : i32
    %c0_i32_1 = arith.constant 0 : i32
    return %c0_i32, %c0_i32_0 : i32, i32
  }
  func.func @transform_2(%arg0: i32) -> (i32, i32, i32) {
    %c0_i32 = arith.constant 0 : i32
    %c0_i32_0 = arith.constant 0 : i32
    %c0_i32_1 = arith.constant 0 : i32
    return %arg0, %c0_i32, %c0_i32_0 : i32, i32, i32
  }
}

</mosaic_0001>

<llo_original>
// kernel: tpu_custom_call.1
$region0: #{tpu_custom_call.1}
  #allocation0 [shape = 'u32[]', space=smem, size = 0x4, offset = 0x4, fixed_abs, tag = 'smem constant byte address 0x4 - core index']
  #allocation1 [shape = 'u32[144,128]{1,0:T(1,128)}', space=vmem, size = 0x12000, scoped, tag = 'internal scratch']
  %s0 = inlined_call_operand.hbm [shape: f32[2,8,32], index: 0, kind: input, shape index: {}]
  %s1 = inlined_call_operand.hbm [shape: f32[32,48], index: 1, kind: input, shape index: {}]
  %s2 = inlined_call_operand.hbm [shape: f32[2,8,16], index: 2, kind: output, shape index: {}]
  %s3 = sld [smem:[#allocation0]]
  $region49: #{tpu_custom_call.1} parent=0
    _
  %s5 = ssub.s32 1, %s3
  %s6 = scalar_select 0, %s5, %s3
  $region1: #{tpu_custom_call.1} parent=0
    #allocation2 [shape = 'u8[8192]{0}', space=vmem, size = 0x2000, scoped, tag = 'input window, operand 0']
    #allocation3 [shape = 's32[2]{0}', space=sflag, size = 0x8, scoped, tag = 'scoped memory for tpu_custom_call.1']
    #allocation4 [shape = 's32[2]{0}', space=sflag, size = 0x8, scoped, tag = 'scoped memory for tpu_custom_call.1']
    #allocation5 [shape = 'u8[16384]{0}', space=vmem, size = 0x4000, scoped, tag = 'input window, operand 1, single buffered']
    #allocation6 [shape = 's32[1]{0}', space=sflag, size = 0x4, scoped, tag = 'scoped memory for tpu_custom_call.1']
    #allocation7 [shape = 'u8[8192]{0}', space=vmem, size = 0x2000, scoped, tag = 'output window, operand 0']
    %7 = vsyncpa [#allocation3], 0
    %s8 = scalar_lea.sflag [#allocation3], 1
    %9 = vsyncpa %s8, 0
    %10 = vsyncpa [#allocation6], 0
    %11 = vsyncpa [#allocation4], 0
    %s12 = scalar_lea.sflag [#allocation4], 1
    %13 = vsyncpa %s12, 0
    loop: start=0, step=1, limit=4
    $region2: #{tpu_custom_call.1} parent=1 // loop_pre_header
      _
    $region3: #{tpu_custom_call.1} parent=1 // loop_header
      %s15 = sphi 0, %s19
      %p16 = scmp.ge.s32.totalorder %s15, 4
      %s25 = sphi 0, %s27
      %s28 = sphi 0, %s25
      %s29 = sphi 0, %s28
      %s45 = sphi 0, %s29
      %s49 = sphi 0, %s49
      %s51 = sphi 0, %s49
      %s52 = sphi 0, %s51
      %s66 = sphi 0, %s52
      %s72 = sphi 0, %s74
      %s75 = sphi 0, %s72
      %s76 = sphi 0, %s75
      %s92 = sphi 0, %s76
    $region4: #{tpu_custom_call.1} parent=1 // loop_header_branch
      %18 = sbr.rel (%p16) target = $region8
    $region5: #{tpu_custom_call.1} parent=1 // loop_body
      %s20 = ssub.s32 %s15, 1
      %s21 = ssub.s32 %s15, 2
      %s22 = sadd.s32 %s15, 1
      %s23 = ssub.s32 %s15, %s22
      %p24 = scmp.eq.s32.totalorder %s23, 0
      %s26 = sadd.s32 %s25, 1
      %s27 = scalar_select %p24, %s25, %s26
      %p30 = pneg %p24
      %p31 = scmp.eq.s32.totalorder %s15, 1
      %p32 = por %p30, %p31
      %p33 = scmp.ne.s32.totalorder %s25, %s28
      %p34 = scmp.eq.s32.totalorder %s15, 0
      %p35 = por %p33, %p34
      %p36 = scmp.ne.s32.totalorder %s25, %s28
      %p37 = scmp.eq.s32.totalorder %s20, 1
      %p38 = por %p36, %p37
      %p39 = scmp.ne.s32.totalorder %s28, %s29
      %p40 = scmp.eq.s32.totalorder %s20, 0
      %p41 = por %p39, %p40
      %p42 = scmp.ne.s32.totalorder %s28, %s29
      %p43 = scmp.eq.s32.totalorder %s21, 1
      %p44 = por %p42, %p43
      %p46 = scmp.ne.s32.totalorder %s29, %s45
      %p47 = scmp.eq.s32.totalorder %s21, 0
      %p48 = por %p46, %p47
      %s50 = sadd.s32 %s49, 1
      %p53 = scmp.eq.s32.totalorder %s15, 1
      %p54 = scmp.ne.s32.totalorder %s49, %s51
      %p55 = scmp.eq.s32.totalorder %s15, 0
      %p56 = por %p54, %p55
      %p57 = scmp.ne.s32.totalorder %s49, %s51
      %p58 = scmp.eq.s32.totalorder %s20, 1
      %p59 = por %p57, %p58
      %p60 = scmp.ne.s32.totalorder %s51, %s52
      %p61 = scmp.eq.s32.totalorder %s20, 0
      %p62 = por %p60, %p61
      %p63 = scmp.ne.s32.totalorder %s51, %s52
      %p64 = scmp.eq.s32.totalorder %s21, 1
      %p65 = por %p63, %p64
      %p67 = scmp.ne.s32.totalorder %s52, %s66
      %p68 = scmp.eq.s32.totalorder %s21, 0
      %p69 = por %p67, %p68
      %s70 = ssub.s32 %s15, %s22
      %p71 = scmp.eq.s32.totalorder %s70, 0
      %s73 = sadd.s32 %s72, 1
      %s74 = scalar_select %p71, %s72, %s73
      %p77 = pneg %p71
      %p78 = scmp.eq.s32.totalorder %s15, 1
      %p79 = por %p77, %p78
      %p80 = scmp.ne.s32.totalorder %s72, %s75
      %p81 = scmp.eq.s32.totalorder %s15, 0
      %p82 = por %p80, %p81
      %p83 = scmp.ne.s32.totalorder %s72, %s75
      %p84 = scmp.eq.s32.totalorder %s20, 1
      %p85 = por %p83, %p84
      %p86 = scmp.ne.s32.totalorder %s75, %s76
      %p87 = scmp.eq.s32.totalorder %s20, 0
      %p88 = por %p86, %p87
      %p89 = scmp.ne.s32.totalorder %s75, %s76
      %p90 = scmp.eq.s32.totalorder %s21, 1
      %p91 = por %p89, %p90
      %p93 = scmp.ne.s32.totalorder %s76, %s92
      %p94 = scmp.eq.s32.totalorder %s21, 0
      %p95 = por %p93, %p94
      %p96 = scmp.le.s32.totalorder 1, %s15
      %p97 = scmp.lt.s32.totalorder %s15, 3
      %p98 = pnand %p96, %p97
      %p99 = pneg %p98
      // Predicated region
      $region9: #{tpu_custom_call.1} parent=5 // pred_check
        _
      $region10: #{tpu_custom_call.1} parent=5 // pred_check_branch
        %101 = sbr.rel (%p98) target = $region12
      $region11: #{tpu_custom_call.1} parent=5 // pred_region
        %s102 = ssub.s32 %s15, 1
        // Predicated region
        $region13: #{tpu_custom_call.1} parent=11 // pred_check
          %p103 = pneg %p62
        $region14: #{tpu_custom_call.1} parent=11 // pred_check_branch
          %105 = sbr.rel (%p103) target = $region16
        $region15: #{tpu_custom_call.1} parent=11 // pred_region
          %s107 = ssub.s32 512, 512
          %108 = vsyncadd [#allocation6], %s107
          %s109 = sshll.u32 [#allocation5], 4
          %s110 = int_to_ptr.vmem [resolvable:$true] %s109
          %115 = dma.hbm_to_vmem [thread:$0]  %s1, 512, %s110, [#allocation6], 128, 128, 8
        $region16: #{tpu_custom_call.1} parent=11 // pred_fallthru
          _
      $region12: #{tpu_custom_call.1} parent=5 // pred_fallthru
        _
      %p116 = scmp.lt.s32.totalorder %s15, 2
      // Predicated region
      $region17: #{tpu_custom_call.1} parent=5 // pred_check
        %p117 = pneg %p116
      $region18: #{tpu_custom_call.1} parent=5 // pred_check_branch
        %119 = sbr.rel (%p117) target = $region20
      $region19: #{tpu_custom_call.1} parent=5 // pred_region
        // Predicated region
        $region21: #{tpu_custom_call.1} parent=19 // pred_check
          %p120 = pneg %p35
        $region22: #{tpu_custom_call.1} parent=19 // pred_check_branch
          %122 = sbr.rel (%p120) target = $region24
        $region23: #{tpu_custom_call.1} parent=19 // pred_region
          %s123 = sand.u32 %s25, 1
          %s124 = scalar_lea.sflag [#allocation3], %s123
          %s125 = sand.u32 %s25, 1
          %s126 = smul.addr %s125, 8
          %s127 = scalar_lea.vmem [#allocation2], %s126
          %s129 = ssub.s32 128, 128
          %130 = vsyncadd %s124, %s129
          %s131 = smul.addr %s15, 128
          %s132 = scalar_lea.hbm %s0, %s131
          %s134 = sshll.u32 %s127, 4
          %s135 = int_to_ptr.vmem [resolvable:$true] %s134
          %137 = dma.hbm_to_vmem [thread:$0]  %s132, 128, %s135, %s124
        $region24: #{tpu_custom_call.1} parent=19 // pred_fallthru
          _
      $region20: #{tpu_custom_call.1} parent=5 // pred_fallthru
        _
      %p138 = scmp.le.s32.totalorder 1, %s15
      %p139 = scmp.lt.s32.totalorder %s15, 3
      %p140 = pnand %p138, %p139
      %p141 = pneg %p140
      // Predicated region
      $region25: #{tpu_custom_call.1} parent=5 // pred_check
        _
      $region26: #{tpu_custom_call.1} parent=5 // pred_check_branch
        %143 = sbr.rel (%p140) target = $region28
      $region27: #{tpu_custom_call.1} parent=5 // pred_region
        %s144 = ssub.s32 %s15, 1
        %s145 = sand.u32 %s28, 1
        %s146 = scalar_lea.sflag [#allocation3], %s145
        %s147 = sand.u32 %s28, 1
        %s148 = smul.addr %s147, 8
        %s149 = scalar_lea.vmem [#allocation2], %s148
        // Predicated region
        $region29: #{tpu_custom_call.1} parent=27 // pred_check
          %p150 = pneg %p41
        $region30: #{tpu_custom_call.1} parent=27 // pred_check_branch
          %152 = sbr.rel (%p150) target = $region32
        $region31: #{tpu_custom_call.1} parent=27 // pred_region
          %153 = dma.done %s146, 128
        $region32: #{tpu_custom_call.1} parent=27 // pred_fallthru
          _
        // Predicated region
        $region33: #{tpu_custom_call.1} parent=27 // pred_check
          %p154 = pneg %p62
        $region34: #{tpu_custom_call.1} parent=27 // pred_check_branch
          %156 = sbr.rel (%p154) target = $region36
        $region35: #{tpu_custom_call.1} parent=27 // pred_region
          %157 = dma.done [#allocation6], 512
        $region36: #{tpu_custom_call.1} parent=27 // pred_fallthru
          _
        %s158 = sand.u32 %s28, 1
        %s159 = scalar_lea.sflag [#allocation3], %s158
        %s160 = sand.u32 %s28, 1
        %s161 = smul.addr %s160, 8
        %s162 = scalar_lea.vmem [#allocation2], %s161
        %p163 = pneg %p41
        %p164 = pneg %p38
        %p165 = pneg %p62
        %p166 = pneg %p59
        %p167 = pneg %p88
        %p168 = pneg %p85
        %s169 = sand.u32 %s75, 1
        %s170 = scalar_lea.sflag [#allocation4], %s169
        %s171 = sand.u32 %s75, 1
        %s172 = smul.addr %s171, 8
        %s173 = scalar_lea.vmem [#allocation7], %s172
        %v174 = vld [vmem:[%s149] sm:$0xff]
        %v175 = vld [vmem:[#allocation5] sm:$0xff]
        %v176 = vld [vmem:[#allocation5 + $0x8] sm:$0xff]
        %v177 = vld [vmem:[#allocation5 + $0x10] sm:$0xff]
        %v178 = vld [vmem:[#allocation5 + $0x18] sm:$0xff]
        %vm179 = vcmask 261120
        %v181 = vsel %vm179, %v174, 0
        %183 = vmatprep.subr.mxu0 0.0
        %184 = vmatpush1.msra.mxu0 0.0
        %185 = vmatprep.subr.mxu0 0.0
        %186 = vmatpush1.msra.mxu0 0.0
        %187 = vmatprep.subr.mxu0 0.0
        %188 = vmatpush1.msra.mxu0 0.0
        %189 = vmatprep.subr.mxu0 0.0
        %190 = vmatpush1.msra.mxu0 0.0
        %191 = vmatprep.subr.mxu0 0.0
        %192 = vmatpush1.msra.mxu0 0.0
        %193 = vmatprep.subr.mxu0 0.0
        %194 = vmatpush1.msra.mxu0 0.0
        %195 = vmatprep.subr.mxu0 0.0
        %196 = vmatpush1.msra.mxu0 0.0
        %197 = vmatprep.subr.mxu0 0.0
        %198 = vmatpush1.msra.mxu0 0.0
        %199 = vmatprep.subr.mxu0 0.0
        %200 = vmatpush1.msra.mxu0 0.0
        %201 = vmatprep.subr.mxu0 0.0
        %202 = vmatpush1.msra.mxu0 0.0
        %203 = vmatprep.subr.mxu0 0.0
        %204 = vmatpush1.msra.mxu0 0.0
        %205 = vmatprep.subr.mxu0 0.0
        %206 = vmatpush1.msra.mxu0 0.0
        %207 = vmatprep.subr.mxu0 0.0
        %208 = vmatpush1.msra.mxu0 %v178
        %209 = vmatprep.subr.mxu0 0.0
        %210 = vmatpush1.msra.mxu0 %v177
        %211 = vmatprep.subr.mxu0 0.0
        %212 = vmatpush1.msra.mxu0 %v176
        %213 = vmatprep.subr.mxu0 0.0
        %214 = vmatpush1.msra.mxu0 %v175
        %215 = vmatprep.subr.mxu0 0.0
        %216 = vmatpush2.msra.mxu0 0.0
        %217 = vmatprep.subr.mxu0 0.0
        %218 = vmatpush2.msra.mxu0 0.0
        %219 = vmatprep.subr.mxu0 0.0
        %220 = vmatpush2.msra.mxu0 0.0
        %221 = vmatprep.subr.mxu0 0.0
        %222 = vmatpush2.msra.mxu0 0.0
        %223 = vmatprep.subr.mxu0 0.0
        %224 = vmatpush2.msra.mxu0 0.0
        %225 = vmatprep.subr.mxu0 0.0
        %226 = vmatpush2.msra.mxu0 0.0
        %227 = vmatprep.subr.mxu0 0.0
        %228 = vmatpush2.msra.mxu0 0.0
        %229 = vmatprep.subr.mxu0 0.0
        %230 = vmatpush2.msra.mxu0 0.0
        %231 = vmatprep.subr.mxu0 0.0
        %232 = vmatpush2.msra.mxu0 0.0
        %233 = vmatprep.subr.mxu0 0.0
        %234 = vmatpush2.msra.mxu0 0.0
        %235 = vmatprep.subr.mxu0 0.0
        %236 = vmatpush2.msra.mxu0 0.0
        %237 = vmatprep.subr.mxu0 0.0
        %238 = vmatpush2.msra.mxu0 0.0
        %239 = vmatprep.subr.mxu0 0.0
        %240 = vmatpush2.msra.mxu0 0.0
        %241 = vmatprep.subr.mxu0 0.0
        %242 = vmatpush2.msra.mxu0 0.0
        %243 = vmatprep.subr.mxu0 0.0
        %244 = vmatpush2.msra.mxu0 0.0
        %245 = vmatprep.subr.mxu0 0.0
        %246 = vmatpush2.msra.mxu0 0.0
        %247 = vmatprep.mubr.f32.mxu0 0.0
        %248 = vmatmul.mubr.f32.gmra.mxu0 %v181
        %v249 = vpop.f32.mrf.mxu0
        %v250 = vadd.f32 0.0, %v249
        %v251 = vpop.f32.mrf.mxu0
        %252 = vdwg.mxu0
        %v253 = vmul.f32 %v250, 0.25
        %255 = vrot.lane.b32.xlu0 %v253, 112
        %v256 = vpop.permute.xlu0 %255
        %vm257 = vcmask 130048
        %v258 = vsel %vm257, %v256, 0
        %v261 = vsel %vm257, %v250, 0
        %263 = vmatprep.subr.mxu0 0.0
        %264 = vmatpush1.xpose.msra.mxu0 0.0
        %265 = vmatprep.subr.mxu0 0.0
        %266 = vmatpush1.xpose.msra.mxu0 0.0
        %267 = vmatprep.subr.mxu0 0.0
        %268 = vmatpush1.xpose.msra.mxu0 0.0
        %269 = vmatprep.subr.mxu0 0.0
        %270 = vmatpush1.xpose.msra.mxu0 0.0
        %271 = vmatprep.subr.mxu0 0.0
        %272 = vmatpush1.xpose.msra.mxu0 0.0
        %273 = vmatprep.subr.mxu0 0.0
        %274 = vmatpush1.xpose.msra.mxu0 0.0
        %275 = vmatprep.subr.mxu0 0.0
        %276 = vmatpush1.xpose.msra.mxu0 0.0
        %277 = vmatprep.subr.mxu0 0.0
        %278 = vmatpush1.xpose.msra.mxu0 0.0
        %279 = vmatprep.subr.mxu0 0.0
        %280 = vmatpush1.xpose.msra.mxu0 0.0
        %281 = vmatprep.subr.mxu0 0.0
        %282 = vmatpush1.xpose.msra.mxu0 0.0
        %283 = vmatprep.subr.mxu0 0.0
        %284 = vmatpush1.xpose.msra.mxu0 0.0
        %285 = vmatprep.subr.mxu0 0.0
        %286 = vmatpush1.xpose.msra.mxu0 0.0
        %287 = vmatprep.subr.mxu0 0.0
        %288 = vmatpush1.xpose.msra.mxu0 0.0
        %289 = vmatprep.subr.mxu0 0.0
        %290 = vmatpush1.xpose.msra.mxu0 0.0
        %291 = vmatprep.subr.mxu0 0.0
        %292 = vmatpush1.xpose.msra.mxu0 0.0
        %293 = vmatprep.subr.mxu0 0.0
        %294 = vmatpush1.xpose.msra.mxu0 %v261
        %295 = vmatprep.subr.mxu0 0.0
        %296 = vmatpush2.xpose.msra.mxu0 0.0
        %297 = vmatprep.subr.mxu0 0.0
        %298 = vmatpush2.xpose.msra.mxu0 0.0
        %299 = vmatprep.subr.mxu0 0.0
        %300 = vmatpush2.xpose.msra.mxu0 0.0
        %301 = vmatprep.subr.mxu0 0.0
        %302 = vmatpush2.xpose.msra.mxu0 0.0
        %303 = vmatprep.subr.mxu0 0.0
        %304 = vmatpush2.xpose.msra.mxu0 0.0
        %305 = vmatprep.subr.mxu0 0.0
        %306 = vmatpush2.xpose.msra.mxu0 0.0
        %307 = vmatprep.subr.mxu0 0.0
        %308 = vmatpush2.xpose.msra.mxu0 0.0
        %309 = vmatprep.subr.mxu0 0.0
        %310 = vmatpush2.xpose.msra.mxu0 0.0
        %311 = vmatprep.subr.mxu0 0.0
        %312 = vmatpush2.xpose.msra.mxu0 0.0
        %313 = vmatprep.subr.mxu0 0.0
        %314 = vmatpush2.xpose.msra.mxu0 0.0
        %315 = vmatprep.subr.mxu0 0.0
        %316 = vmatpush2.xpose.msra.mxu0 0.0
        %317 = vmatprep.subr.mxu0 0.0
        %318 = vmatpush2.xpose.msra.mxu0 0.0
        %319 = vmatprep.subr.mxu0 0.0
        %320 = vmatpush2.xpose.msra.mxu0 0.0
        %321 = vmatprep.subr.mxu0 0.0
        %322 = vmatpush2.xpose.msra.mxu0 0.0
        %323 = vmatprep.subr.mxu0 0.0
        %324 = vmatpush2.xpose.msra.mxu0 0.0
        %325 = vmatprep.subr.mxu0 0.0
        %326 = vmatpush2.xpose.msra.mxu0 0.0
        %327 = vmatprep.mubr.f32.mxu0 0.0
        %328 = vmatmul.mubr.f32.gmra.mxu0 %v258
        %v329 = vpop.f32.mrf.mxu0
        %v330 = vadd.f32 0.0, %v329
        %v331 = vpop.f32.mrf.mxu0
        %332 = vdwg.mxu0
        %v333 = vlaneseq
        %v334 = vshrl.u32 %v333, 7
        %v335 = vlaneseq
        %v336 = vand.u32 %v335, 127
        %vm337 = vcmp.le.s32.totalorder %v336, %v334
        %v338 = vsel %vm337, %v330, -1e+30
        %vm339 = vcmask 64512
        %v340 = vsel %vm339, %v338, -inf
        %341 = vmax.xlane.f32.xlu0 %v340
        %v342 = vpop.xlane.xlu0 %341
        %v343 = vsub.f32 %v338, %v342
        %v344 = vmul.f32 %v343, 1.442695
        %v345 = vpow.pop %v344
        %v346 = vsel %vm339, %v345, 0.0
        %347 = vadd.xlane.f32.xlu0 %v346
        %v348 = vpop.xlane.xlu0 %347
        %349 = vrot.lane.b32.xlu0 %v250, 96
        %v350 = vpop.permute.xlu0 %349
        %v353 = vsel %vm339, %v345, 0
        %355 = vmatprep.subr.mxu0 0.0
        %356 = vmatpush1.msra.mxu0 0.0
        %357 = vmatprep.subr.mxu0 0.0
        %358 = vmatpush1.msra.mxu0 0.0
        %359 = vmatprep.subr.mxu0 0.0
        %360 = vmatpush1.msra.mxu0 0.0
        %361 = vmatprep.subr.mxu0 0.0
        %362 = vmatpush1.msra.mxu0 0.0
        %363 = vmatprep.subr.mxu0 0.0
        %364 = vmatpush1.msra.mxu0 0.0
        %365 = vmatprep.subr.mxu0 0.0
        %366 = vmatpush1.msra.mxu0 0.0
        %367 = vmatprep.subr.mxu0 0.0
        %368 = vmatpush1.msra.mxu0 0.0
        %369 = vmatprep.subr.mxu0 0.0
        %370 = vmatpush1.msra.mxu0 0.0
        %371 = vmatprep.subr.mxu0 0.0
        %372 = vmatpush1.msra.mxu0 0.0
        %373 = vmatprep.subr.mxu0 0.0
        %374 = vmatpush1.msra.mxu0 0.0
        %375 = vmatprep.subr.mxu0 0.0
        %376 = vmatpush1.msra.mxu0 0.0
        %377 = vmatprep.subr.mxu0 0.0
        %378 = vmatpush1.msra.mxu0 0.0
        %379 = vmatprep.subr.mxu0 0.0
        %380 = vmatpush1.msra.mxu0 0.0
        %381 = vmatprep.subr.mxu0 0.0
        %382 = vmatpush1.msra.mxu0 0.0
        %383 = vmatprep.subr.mxu0 0.0
        %384 = vmatpush1.msra.mxu0 0.0
        %385 = vmatprep.subr.mxu0 0.0
        %386 = vmatpush1.msra.mxu0 %v350
        %387 = vmatprep.subr.mxu0 0.0
        %388 = vmatpush2.msra.mxu0 0.0
        %389 = vmatprep.subr.mxu0 0.0
        %390 = vmatpush2.msra.mxu0 0.0
        %391 = vmatprep.subr.mxu0 0.0
        %392 = vmatpush2.msra.mxu0 0.0
        %393 = vmatprep.subr.mxu0 0.0
        %394 = vmatpush2.msra.mxu0 0.0
        %395 = vmatprep.subr.mxu0 0.0
        %396 = vmatpush2.msra.mxu0 0.0
        %397 = vmatprep.subr.mxu0 0.0
        %398 = vmatpush2.msra.mxu0 0.0
        %399 = vmatprep.subr.mxu0 0.0
        %400 = vmatpush2.msra.mxu0 0.0
        %401 = vmatprep.subr.mxu0 0.0
        %402 = vmatpush2.msra.mxu0 0.0
        %403 = vmatprep.subr.mxu0 0.0
        %404 = vmatpush2.msra.mxu0 0.0
        %405 = vmatprep.subr.mxu0 0.0
        %406 = vmatpush2.msra.mxu0 0.0
        %407 = vmatprep.subr.mxu0 0.0
        %408 = vmatpush2.msra.mxu0 0.0
        %409 = vmatprep.subr.mxu0 0.0
        %410 = vmatpush2.msra.mxu0 0.0
        %411 = vmatprep.subr.mxu0 0.0
        %412 = vmatpush2.msra.mxu0 0.0
        %413 = vmatprep.subr.mxu0 0.0
        %414 = vmatpush2.msra.mxu0 0.0
        %415 = vmatprep.subr.mxu0 0.0
        %416 = vmatpush2.msra.mxu0 0.0
        %417 = vmatprep.subr.mxu0 0.0
        %418 = vmatpush2.msra.mxu0 0.0
        %419 = vmatprep.mubr.f32.mxu0 0.0
        %420 = vmatmul.mubr.f32.gmra.mxu0 %v353
        %v421 = vpop.f32.mrf.mxu0
        %v422 = vadd.f32 0.0, %v421
        %v423 = vpop.f32.mrf.mxu0
        %424 = vdwg.mxu0
        %v425 = vrcp.pop %v348
        %v426 = vmul.f32 %v348, %v425
        %v427 = vsub.f32 2.0, %v426
        %v428 = vmul.f32 %v425, %v427
        %v429 = vmul.f32 %v422, %v428
        %430 = vst.msk [vmem:[%s173] sm:$0xff] %vm257, %v429
        %s431 = sand.u32 %s75, 1
        %s432 = scalar_lea.sflag [#allocation4], %s431
        %s433 = sand.u32 %s75, 1
        %s434 = smul.addr %s433, 8
        %s435 = scalar_lea.vmem [#allocation7], %s434
        // Predicated region
        $region37: #{tpu_custom_call.1} parent=27 // pred_check
          %p436 = pneg %p85
        $region38: #{tpu_custom_call.1} parent=27 // pred_check_branch
          %438 = sbr.rel (%p436) target = $region40
        $region39: #{tpu_custom_call.1} parent=27 // pred_region
          %s440 = ssub.s32 128, 128
          %441 = vsyncadd %s432, %s440
          %s442 = smul.addr %s20, 128
          %s443 = scalar_lea.hbm %s2, %s442
          %s445 = sshll.u32 %s435, 4
          %s446 = int_to_ptr.vmem [resolvable:$true] %s445
          %448 = dma.vmem_to_hbm [thread:$0]  %s446, 128, %s443, %s432
        $region40: #{tpu_custom_call.1} parent=27 // pred_fallthru
          _
      $region28: #{tpu_custom_call.1} parent=5 // pred_fallthru
        _
      %p449 = scmp.le.s32.totalorder 2, %s15
      // Predicated region
      $region41: #{tpu_custom_call.1} parent=5 // pred_check
        %p450 = pneg %p449
      $region42: #{tpu_custom_call.1} parent=5 // pred_check_branch
        %452 = sbr.rel (%p450) target = $region44
      $region43: #{tpu_custom_call.1} parent=5 // pred_region
        %s453 = ssub.s32 %s15, 2
        // Predicated region
        $region45: #{tpu_custom_call.1} parent=43 // pred_check
          %p454 = pneg %p91
        $region46: #{tpu_custom_call.1} parent=43 // pred_check_branch
          %456 = sbr.rel (%p454) target = $region48
        $region47: #{tpu_custom_call.1} parent=43 // pred_region
          %s457 = sand.u32 %s76, 1
          %s458 = scalar_lea.sflag [#allocation4], %s457
          %s459 = sand.u32 %s76, 1
          %s460 = smul.addr %s459, 8
          %s461 = scalar_lea.vmem [#allocation7], %s460
          %462 = dma.done %s458, 128
        $region48: #{tpu_custom_call.1} parent=43 // pred_fallthru
          _
      $region44: #{tpu_custom_call.1} parent=5 // pred_fallthru
        _
    $region6: #{tpu_custom_call.1} parent=1 // loop_footer
      %s19 = sadd.s32 1, %s15
    $region7: #{tpu_custom_call.1} parent=1 // loop_footer_branch
      %14 = sbr.rel target = $region3
    $region8: #{tpu_custom_call.1} parent=1 // loop_exit
      _
    %463 = vsyncpa [#allocation3], 1
    %s464 = scalar_lea.sflag [#allocation3], 1
    %465 = vsyncpa %s464, 1
    %466 = vsyncpa [#allocation6], 1
    %467 = vsyncpa [#allocation4], 1
    %s468 = scalar_lea.sflag [#allocation4], 1
    %469 = vsyncpa %s468, 1

</llo_original>
